<compile_context>
chip_gen: v7x
topology: tpu7x:2x2x1
jax: 0.10.0
libtpu: 0.0.40
codegen_flags: <defaults>
</compile_context>

<pallas_src>
import jax
import jax.numpy as jnp
import numpy as np
from jax.experimental import pallas as pl
from jax.experimental.pallas import tpu as pltpu


def classifier_kernel(x_ref, we_ref, wh_ref, bh_ref, o_ref, acc_ref):
    # x_ref : (tb, ch, tp, patch_len)   batch-outer tile, one patch tile
    # we_ref: (patch_len, d_model)      encoder stand-in weight   (compute dtype)
    # wh_ref: (ch*d_model, n_pad)       head weight, 1/num_patch folded in (compute dtype)
    # bh_ref: (1, n_pad)                head bias + folded encoder-bias term (f32)
    # o_ref : (tb, n_pad)               lane-dense output block
    # acc_ref: (tb, ch*d_model) f32     pooled-sum accumulator across patch steps
    p = pl.program_id(1)

    @pl.when(p == 0)
    def _():
        acc_ref[...] = jnp.zeros_like(acc_ref)

    tb, ch, tp, patch_len = x_ref.shape
    d_model = we_ref.shape[1]

    # --- encoder (stand-in): ONE GEMM over every (sample, channel, patch) row ---
    # tp is a multiple of 8 and patch_len stays the minor dim, so this reshape is
    # layout-free (no VMEM relayout copy).
    x2 = x_ref[...].reshape(tb * ch * tp, patch_len).astype(we_ref.dtype)
    enc = jnp.dot(x2, we_ref[...], preferred_element_type=jnp.float32)

    # --- partial pooling sum over this patch tile; flatten ch-major / d_model-minor ---
    pooled = jnp.sum(enc.reshape(tb, ch, tp, d_model), axis=2)        # (tb, ch, d)
    acc_ref[...] += pooled.reshape(tb, ch * d_model)

    # --- head: single flattened GEMM + lane-dense store on the last patch step ---
    @pl.when(p == pl.num_programs(1) - 1)
    def _():
        y = jnp.dot(acc_ref[...].astype(wh_ref.dtype), wh_ref[...],
                    preferred_element_type=jnp.float32)
        o_ref[...] = (y + bh_ref[...]).astype(o_ref.dtype)


def classifier_forward(X, w_enc, b_enc, w_head, b_head, *, tb=8, tp=None,
                       compute_dtype=jnp.bfloat16, lane=128):
    """X: (bs, num_patch, ch, patch_len)  [PyTorch layout]
       w_enc : (d_model, patch_len)    (torch Linear weight layout)
       b_enc : (d_model,)
       w_head: (n_classes, ch*d_model)
       b_head: (n_classes,)
       tb: batch tile (multiple of 8; sweep 32-128 at real sizes; on v7x cap
           tb <= bs_pad/2 so the "parallel" batch axis keeps both TensorCores busy,
           and re-derive against the 64 MiB VMEM budget).
       tp: patch tile (multiple of 8; default = whole padded num_patch).
       compute_dtype: MXU operand dtype (bf16 on v5e/v6e/v7x; accumulation is f32).
    """
    bs, num_patch, ch, patch_len = X.shape
    d_model = w_enc.shape[0]
    n_classes = w_head.shape[0]

    if tp is None:
        tp = pl.cdiv(num_patch, 8) * 8
    assert tb % 8 == 0 and tp % 8 == 0
    bs_pad = pl.cdiv(bs, tb) * tb
    np_pad = pl.cdiv(num_patch, tp) * tp
    n_pad = pl.cdiv(n_classes, lane) * lane

    # --- wrapper-side layout plumbing only (batch-outer transpose + zero pad) ---
    # Zero-padded batch rows / patches are harmless: the stand-in encoder bias is
    # folded into bh, so padded rows contribute exactly 0 to the pooled sum.
    Xr = jnp.transpose(X, (0, 2, 1, 3))                      # (bs, ch, num_patch, plen)
    Xr = jnp.pad(Xr, ((0, bs_pad - bs), (0, 0), (0, np_pad - num_patch), (0, 0)))

    we = jnp.transpose(w_enc).astype(compute_dtype)          # (patch_len, d_model)

    # Head weight: torch flatten order is ch-major / d_model-minor; fold the
    # 1/num_patch mean scale in f32 BEFORE the compute-dtype cast.
    wh = jnp.transpose(w_head) * (1.0 / num_patch)           # (ch*d_model, n_classes)
    wh = jnp.pad(wh, ((0, 0), (0, n_pad - n_classes))).astype(compute_dtype)

    # Fold the (linear stand-in) encoder bias into the head bias:
    #   mean_p(x @ we^T + be) @ W_h^T  ==  mean_p(x @ we^T) @ W_h^T  +  be-term.
    # TODO(synk): drop this fold when a real (nonlinear) encoder replaces the stand-in.
    bh = b_head + jnp.einsum("d,ncd->n", b_enc,
                             w_head.reshape(n_classes, ch, d_model))
    bh = jnp.pad(bh.reshape(1, n_classes),
                 ((0, 0), (0, n_pad - n_classes))).astype(jnp.float32)

    # --- per-step VMEM footprint; raise the scoped limit only when needed ---
    csize = jnp.dtype(compute_dtype).itemsize
    xsize = X.dtype.itemsize
    vmem_needed = (2 * tb * ch * tp * patch_len * xsize               # x (2-buffered)
                   + tb * ch * tp * d_model * 4                       # enc intermediate
                   + (patch_len * d_model + ch * d_model * n_pad) * csize  # weights (1-buf)
                   + n_pad * 4                                         # bh
                   + tb * ch * d_model * 4                             # accumulator
                   + 2 * tb * n_pad * xsize)                           # output (2-buffered)
    vmem_limit = None
    if vmem_needed > 32 * 1024 * 1024:
        vmem_limit = min(int(vmem_needed * 5 // 4), 96 * 1024 * 1024)

    flops = (2 * bs_pad * ch * np_pad * patch_len * d_model
             + 2 * bs_pad * ch * d_model * n_pad)
    bytes_accessed = (Xr.size * xsize + we.size * csize + wh.size * csize
                      + bh.size * 4 + bs_pad * n_pad * xsize)

    grid = (bs_pad // tb, np_pad // tp)
    out = pl.pallas_call(
        classifier_kernel,
        out_shape=jax.ShapeDtypeStruct((bs_pad, n_pad), X.dtype),
        grid_spec=pltpu.PrefetchScalarGridSpec(
            num_scalar_prefetch=0,
            grid=grid,
            in_specs=[
                pl.BlockSpec((tb, ch, tp, patch_len), lambda b, p: (b, 0, p, 0)),
                pl.BlockSpec((patch_len, d_model), lambda b, p: (0, 0),
                             pipeline_mode=pl.Buffered(1)),
                pl.BlockSpec((ch * d_model, n_pad), lambda b, p: (0, 0),
                             pipeline_mode=pl.Buffered(1)),
                pl.BlockSpec((1, n_pad), lambda b, p: (0, 0),
                             pipeline_mode=pl.Buffered(1)),
            ],
            out_specs=pl.BlockSpec((tb, n_pad), lambda b, p: (b, 0)),
            scratch_shapes=[pltpu.VMEM((tb, ch * d_model), jnp.float32)],
        ),
        compiler_params=pltpu.CompilerParams(
            dimension_semantics=("parallel", "arbitrary"),
            vmem_limit_bytes=vmem_limit,
        ),
        cost_estimate=pl.CostEstimate(flops=flops, transcendentals=0,
                                      bytes_accessed=bytes_accessed),
    )(Xr, we, wh, bh)
    return out[:bs, :n_classes]


def _reference(X, w_enc, b_enc, w_head, b_head):
    bs, num_patch, ch, patch_len = X.shape
    x = jnp.transpose(X, (0, 2, 1, 3)).reshape(bs * ch, num_patch, patch_len)
    enc = jnp.einsum("bnp,dp->bnd", x, w_enc) + b_enc          # encoder_out (stand-in)
    enc = enc.reshape(bs, ch, num_patch, -1)
    enc = jnp.transpose(enc, (0, 1, 3, 2))                     # (bs, ch, d_model, np)
    pooled = enc.mean(-1).reshape(bs, -1)                      # flatten(ch*d_model)
    return pooled @ w_head.T + b_head                          # dropout = identity (eval)


if __name__ == "__main__":
    bs, num_patch, ch, patch_len = 2, 8, 4, 16
    d_model, n_classes = 32, 5

    key = jax.random.PRNGKey(0)
    kx, k1, k2, k3, k4 = jax.random.split(key, 5)
    X = jax.random.normal(kx, (bs, num_patch, ch, patch_len), dtype=jnp.float32)
    w_enc = 0.1 * jax.random.normal(k1, (d_model, patch_len), dtype=jnp.float32)
    b_enc = 0.1 * jax.random.normal(k2, (d_model,), dtype=jnp.float32)
    w_head = 0.1 * jax.random.normal(k3, (n_classes, ch * d_model), dtype=jnp.float32)
    b_head = 0.1 * jax.random.normal(k4, (n_classes,), dtype=jnp.float32)

    y_ref = _reference(X, w_enc, b_enc, w_head, b_head)

    # exact f32 MXU path: tight check against the reference
    y_f32 = classifier_forward(X, w_enc, b_enc, w_head, b_head,
                               compute_dtype=jnp.float32)
    y_f32 = jax.block_until_ready(y_f32)
    np.testing.assert_allclose(np.asarray(y_f32), np.asarray(y_ref),
                               rtol=1e-5, atol=1e-5)

    # default bf16 MXU path (f32 accumulation): looser tolerance
    y_bf16 = classifier_forward(X, w_enc, b_enc, w_head, b_head)
    y_bf16 = jax.block_until_ready(y_bf16)
    np.testing.assert_allclose(np.asarray(y_bf16), np.asarray(y_ref),
                               rtol=3e-2, atol=3e-2)

    print("KERNEL_OK")
</pallas_src>

<mosaic_0001>
module attributes {stable_mosaic.version = 11 : i64} {
  func.func @classifier_kernel(%arg0: i32, %arg1: i32, %arg2: memref<8x4x8x16xf32, #tpu.memory_space<vmem>>, %arg3: memref<16x32xf32, #tpu.memory_space<vmem>>, %arg4: memref<128x128xf32, #tpu.memory_space<vmem>>, %arg5: memref<1x128xf32, #tpu.memory_space<vmem>>, %arg6: memref<8x128xf32, #tpu.memory_space<vmem>>, %arg7: memref<8x128xf32, #tpu.memory_space<vmem>>) attributes {dimension_semantics = [#tpu.dimension_semantics<parallel>, #tpu.dimension_semantics<arbitrary>], iteration_bounds = array<i64: 1, 1>, scalar_prefetch = 0 : i64, scratch_operands = 1 : i64, tpu.core_type = #tpu.core_type<tc>, window_params = [{transform_indices = @transform_0, window_bounds = array<i64: 8, 4, 8, 16>}, {pipeline_mode = #tpu.pipeline_mode<synchronous>, transform_indices = @transform_1, window_bounds = array<i64: 16, 32>}, {pipeline_mode = #tpu.pipeline_mode<synchronous>, transform_indices = @transform_2, window_bounds = array<i64: 128, 128>}, {pipeline_mode = #tpu.pipeline_mode<synchronous>, transform_indices = @transform_3, window_bounds = array<i64: 1, 128>}, {transform_indices = @transform_4, window_bounds = array<i64: 8, 128>}]} {
    %c0_i32 = arith.constant 0 : i32
    %0 = arith.cmpi eq, %arg1, %c0_i32 : i32
    %1 = arith.extui %0 : i1 to i32
    %c0_i32_0 = arith.constant 0 : i32
    %2 = arith.cmpi ne, %1, %c0_i32_0 : i32
    scf.if %2 {
      %cst_13 = arith.constant 0.000000e+00 : f32
      %16 = vector.broadcast %cst_13 : f32 to vector<8x128xf32>
      %c0_14 = arith.constant 0 : index
      %c0_15 = arith.constant 0 : index
      %17 = vector.load %arg7[%c0_14, %c0_15] : memref<8x128xf32, #tpu.memory_space<vmem>>, vector<8x128xf32>
      tpu.vector_store %arg7[%c0_14, %c0_15], %16 {strides = array<i32>} : memref<8x128xf32, #tpu.memory_space<vmem>>, vector<8x128xf32>,
    } else {
    }
    %c0 = arith.constant 0 : index
    %c0_1 = arith.constant 0 : index
    %c0_2 = arith.constant 0 : index
    %c0_3 = arith.constant 0 : index
    %3 = vector.load %arg2[%c0, %c0_1, %c0_2, %c0_3] : memref<8x4x8x16xf32, #tpu.memory_space<vmem>>, vector<8x4x8x16xf32>
    %4 = vector.shape_cast %3 : vector<8x4x8x16xf32> to vector<256x16xf32>
    %c0_4 = arith.constant 0 : index
    %c0_5 = arith.constant 0 : index
    %5 = vector.load %arg3[%c0_4, %c0_5] : memref<16x32xf32, #tpu.memory_space<vmem>>, vector<16x32xf32>
    %cst = arith.constant dense<0.000000e+00> : vector<256x32xf32>
    %6 = tpu.matmul %4, %5, %cst {dimension_numbers = #tpu.dot_dimension_numbers<[1], [0], [0], [1], [0, 0, 1, 1], [], []>} : vector<256x16xf32>, vector<16x32xf32>, vector<256x32xf32> -> vector<256x32xf32>
    %7 = vector.shape_cast %6 : vector<256x32xf32> to vector<8x4x8x32xf32>
    %cst_6 = arith.constant dense<0.000000e+00> : vector<8x4x32xf32>
    %8 = vector.multi_reduction <add>, %7, %cst_6 [2] : vector<8x4x8x32xf32> to vector<8x4x32xf32>
    %c0_7 = arith.constant 0 : index
    %c0_8 = arith.constant 0 : index
    %9 = vector.load %arg7[%c0_7, %c0_8] : memref<8x128xf32, #tpu.memory_space<vmem>>, vector<8x128xf32>
    %10 = vector.shape_cast %8 : vector<8x4x32xf32> to vector<8x128xf32>
    %11 = arith.addf %9, %10 : vector<8x128xf32>
    %c0_9 = arith.constant 0 : index
    %c0_10 = arith.constant 0 : index
    %12 = vector.load %arg7[%c0_9, %c0_10] : memref<8x128xf32, #tpu.memory_space<vmem>>, vector<8x128xf32>
    tpu.vector_store %arg7[%c0_9, %c0_10], %11 {strides = array<i32>} : memref<8x128xf32, #tpu.memory_space<vmem>>, vector<8x128xf32>,
    %c0_i32_11 = arith.constant 0 : i32
    %13 = arith.cmpi eq, %arg1, %c0_i32_11 : i32
    %14 = arith.extui %13 : i1 to i32
    %c0_i32_12 = arith.constant 0 : i32
    %15 = arith.cmpi ne, %14, %c0_i32_12 : i32
    scf.if %15 {
      %c0_13 = arith.constant 0 : index
      %c0_14 = arith.constant 0 : index
      %16 = vector.load %arg7[%c0_13, %c0_14] : memref<8x128xf32, #tpu.memory_space<vmem>>, vector<8x128xf32>
      %c0_15 = arith.constant 0 : index
      %c0_16 = arith.constant 0 : index
      %17 = vector.load %arg4[%c0_15, %c0_16] : memref<128x128xf32, #tpu.memory_space<vmem>>, vector<128x128xf32>
      %cst_17 = arith.constant dense<0.000000e+00> : vector<8x128xf32>
      %18 = tpu.matmul %16, %17, %cst_17 {dimension_numbers = #tpu.dot_dimension_numbers<[1], [0], [0], [1], [0, 0, 1, 1], [], []>} : vector<8x128xf32>, vector<128x128xf32>, vector<8x128xf32> -> vector<8x128xf32>
      %c0_18 = arith.constant 0 : index
      %c0_19 = arith.constant 0 : index
      %19 = vector.load %arg5[%c0_18, %c0_19] : memref<1x128xf32, #tpu.memory_space<vmem>>, vector<1x128xf32>
      %20 = vector.broadcast %19 : vector<1x128xf32> to vector<8x128xf32>
      %21 = arith.addf %18, %20 : vector<8x128xf32>
      %c0_20 = arith.constant 0 : index
      %c0_21 = arith.constant 0 : index
      %22 = vector.load %arg6[%c0_20, %c0_21] : memref<8x128xf32, #tpu.memory_space<vmem>>, vector<8x128xf32>
      tpu.vector_store %arg6[%c0_20, %c0_21], %21 {strides = array<i32>} : memref<8x128xf32, #tpu.memory_space<vmem>>, vector<8x128xf32>,
    } else {
    }
    return
  }
  func.func @transform_0(%arg0: i32, %arg1: i32) -> (i32, i32, i32, i32) {
    %c0_i32 = arith.constant 0 : i32
    %c0_i32_0 = arith.constant 0 : i32
    %c0_i32_1 = arith.constant 0 : i32
    return %arg0, %c0_i32, %arg1, %c0_i32_0 : i32, i32, i32, i32
  }
  func.func @transform_1(%arg0: i32, %arg1: i32) -> (i32, i32) {
    %c0_i32 = arith.constant 0 : i32
    %c0_i32_0 = arith.constant 0 : i32
    %c0_i32_1 = arith.constant 0 : i32
    return %c0_i32, %c0_i32_0 : i32, i32
  }
  func.func @transform_2(%arg0: i32, %arg1: i32) -> (i32, i32) {
    %c0_i32 = arith.constant 0 : i32
    %c0_i32_0 = arith.constant 0 : i32
    %c0_i32_1 = arith.constant 0 : i32
    return %c0_i32, %c0_i32_0 : i32, i32
  }
  func.func @transform_3(%arg0: i32, %arg1: i32) -> (i32, i32) {
    %c0_i32 = arith.constant 0 : i32
    %c0_i32_0 = arith.constant 0 : i32
    %c0_i32_1 = arith.constant 0 : i32
    return %c0_i32, %c0_i32_0 : i32, i32
  }
  func.func @transform_4(%arg0: i32, %arg1: i32) -> (i32, i32) {
    %c0_i32 = arith.constant 0 : i32
    %c0_i32_0 = arith.constant 0 : i32
    return %arg0, %c0_i32 : i32, i32
  }
}

</mosaic_0001>

<llo_original>
// kernel: tpu_custom_call.1
$region0: #{tpu_custom_call.1}
  #allocation0 [shape = 'u32[]', space=smem, size = 0x4, offset = 0x4, fixed_abs, tag = 'smem constant byte address 0x4 - core index']
  #allocation1 [shape = 'u32[144,128]{1,0:T(1,128)}', space=vmem, size = 0x12000, scoped, tag = 'internal scratch']
  #allocation2 [shape = 'f32[8,128]{1,0:T(8,128)}', space=vmem, size = 0x1000, scoped, tag = 'scratch operand']
  %s0 = inlined_call_operand.hbm [shape: f32[8,4,8,16], index: 0, kind: input, shape index: {}]
  %s1 = inlined_call_operand.hbm [shape: f32[16,32], index: 1, kind: input, shape index: {}]
  %s2 = inlined_call_operand.hbm [shape: f32[128,128], index: 2, kind: input, shape index: {}]
  %s3 = inlined_call_operand.vmem [shape: f32[1,128], index: 3, kind: input, shape index: {}]
  %s4 = inlined_call_operand.hbm [shape: f32[8,128], index: 4, kind: output, shape index: {}]
  %s5 = sld [smem:[#allocation0]]
  $region46: #{tpu_custom_call.1} parent=0
    _
  %s7 = ssub.s32 1, %s5
  %s8 = scalar_select 0, %s7, %s5
  $region1: #{tpu_custom_call.1} parent=0
    #allocation3 [shape = 'u8[131072]{0}', space=vmem, size = 0x20000, scoped, tag = 'input window, operand 0, single buffered']
    #allocation4 [shape = 's32[1]{0}', space=sflag, size = 0x4, scoped, tag = 'scoped memory for tpu_custom_call.1']
    #allocation5 [shape = 's32[1]{0}', space=sflag, size = 0x4, scoped, tag = 'scoped memory for tpu_custom_call.1']
    #allocation6 [shape = 'u8[8192]{0}', space=vmem, size = 0x2000, scoped, tag = 'input window, operand 1, single buffered']
    #allocation7 [shape = 's32[1]{0}', space=sflag, size = 0x4, scoped, tag = 'scoped memory for tpu_custom_call.1']
    #allocation8 [shape = 'u8[65536]{0}', space=vmem, size = 0x10000, scoped, tag = 'input window, operand 2, single buffered']
    #allocation9 [shape = 'u8[4096]{0}', space=vmem, size = 0x1000, scoped, tag = 'output window, operand 0, single buffered']
    %9 = vsyncpa [#allocation4], 0
    %10 = vsyncpa [#allocation7], 0
    %11 = vsyncpa [#allocation5], 0
    // Predicated region
    $region2: #{tpu_custom_call.1} parent=1 // pred_check
      _
    $region3: #{tpu_custom_call.1} parent=1 // pred_check_branch
      %13 = sbr.rel (0) target = $region5
    $region4: #{tpu_custom_call.1} parent=1 // pred_region
      %s15 = ssub.s32 4096, 4096
      %16 = vsyncadd [#allocation4], %s15
      %s17 = sshll.u32 [#allocation3], 4
      %s18 = int_to_ptr.vmem [resolvable:$true] %s17
      %23 = dma.hbm_to_vmem [thread:$0]  %s0, 4096, %s18, [#allocation4], 128, 128, 8
    $region5: #{tpu_custom_call.1} parent=1 // pred_fallthru
      _
    // Predicated region
    $region6: #{tpu_custom_call.1} parent=1 // pred_check
      _
    $region7: #{tpu_custom_call.1} parent=1 // pred_check_branch
      %25 = sbr.rel (0) target = $region9
    $region8: #{tpu_custom_call.1} parent=1 // pred_region
      %s27 = ssub.s32 256, 256
      %28 = vsyncadd [#allocation7], %s27
      %s29 = sshll.u32 [#allocation6], 4
      %s30 = int_to_ptr.vmem [resolvable:$true] %s29
      %35 = dma.hbm_to_vmem [thread:$0]  %s1, 256, %s30, [#allocation7], 128, 128, 8
    $region9: #{tpu_custom_call.1} parent=1 // pred_fallthru
      _
    // Predicated region
    $region10: #{tpu_custom_call.1} parent=1 // pred_check
      _
    $region11: #{tpu_custom_call.1} parent=1 // pred_check_branch
      %37 = sbr.rel (0) target = $region13
    $region12: #{tpu_custom_call.1} parent=1 // pred_region
      %s39 = ssub.s32 2048, 2048
      %40 = vsyncadd [#allocation7], %s39
      %s41 = sshll.u32 [#allocation8], 4
      %s42 = int_to_ptr.vmem [resolvable:$true] %s41
      %47 = dma.hbm_to_vmem [thread:$0]  %s2, 2048, %s42, [#allocation7], 128, 128, 8
    $region13: #{tpu_custom_call.1} parent=1 // pred_fallthru
      _
    // Predicated region
    $region14: #{tpu_custom_call.1} parent=1 // pred_check
      _
    $region15: #{tpu_custom_call.1} parent=1 // pred_check_branch
      %49 = sbr.rel (0) target = $region17
    $region16: #{tpu_custom_call.1} parent=1 // pred_region
      _
    $region17: #{tpu_custom_call.1} parent=1 // pred_fallthru
      _
    // Predicated region
    $region18: #{tpu_custom_call.1} parent=1 // pred_check
      _
    $region19: #{tpu_custom_call.1} parent=1 // pred_check_branch
      %51 = sbr.rel (0) target = $region21
    $region20: #{tpu_custom_call.1} parent=1 // pred_region
      %52 = dma.done [#allocation4], 4096
    $region21: #{tpu_custom_call.1} parent=1 // pred_fallthru
      _
    // Predicated region
    $region22: #{tpu_custom_call.1} parent=1 // pred_check
      _
    $region23: #{tpu_custom_call.1} parent=1 // pred_check_branch
      %54 = sbr.rel (0) target = $region25
    $region24: #{tpu_custom_call.1} parent=1 // pred_region
      %55 = dma.done [#allocation7], 256
    $region25: #{tpu_custom_call.1} parent=1 // pred_fallthru
      _
    // Predicated region
    $region26: #{tpu_custom_call.1} parent=1 // pred_check
      _
    $region27: #{tpu_custom_call.1} parent=1 // pred_check_branch
      %57 = sbr.rel (0) target = $region29
    $region28: #{tpu_custom_call.1} parent=1 // pred_region
      %58 = dma.done [#allocation7], 2048
    $region29: #{tpu_custom_call.1} parent=1 // pred_fallthru
      _
    %p59 = scmp.eq.s32.totalorder 0, 0
    // Predicated region
    $region30: #{tpu_custom_call.1} parent=1 // pred_check
      %p60 = pneg %p59
    $region31: #{tpu_custom_call.1} parent=1 // pred_check_branch
      %62 = sbr.rel (%p60) target = $region33
    $region32: #{tpu_custom_call.1} parent=1 // pred_region
      %63 = vst [vmem:[#allocation2] sm:$0xff] 0.0
    $region33: #{tpu_custom_call.1} parent=1 // pred_fallthru
      _
    %v64 = vld [vmem:[#allocation3] sm:$0xff]
    %v65 = vld [vmem:[#allocation3 + $0x8] sm:$0xff]
    %v66 = vld [vmem:[#allocation3 + $0x10] sm:$0xff]
    %v67 = vld [vmem:[#allocation3 + $0x18] sm:$0xff]
    %v68 = vld [vmem:[#allocation3 + $0x20] sm:$0xff]
    %v69 = vld [vmem:[#allocation3 + $0x28] sm:$0xff]
    %v70 = vld [vmem:[#allocation3 + $0x30] sm:$0xff]
    %v71 = vld [vmem:[#allocation3 + $0x38] sm:$0xff]
    %v72 = vld [vmem:[#allocation3 + $0x40] sm:$0xff]
    %v73 = vld [vmem:[#allocation3 + $0x48] sm:$0xff]
    %v74 = vld [vmem:[#allocation3 + $0x50] sm:$0xff]
    %v75 = vld [vmem:[#allocation3 + $0x58] sm:$0xff]
    %v76 = vld [vmem:[#allocation3 + $0x60] sm:$0xff]
    %v77 = vld [vmem:[#allocation3 + $0x68] sm:$0xff]
    %v78 = vld [vmem:[#allocation3 + $0x70] sm:$0xff]
    %v79 = vld [vmem:[#allocation3 + $0x78] sm:$0xff]
    %v80 = vld [vmem:[#allocation3 + $0x80] sm:$0xff]
    %v81 = vld [vmem:[#allocation3 + $0x88] sm:$0xff]
    %v82 = vld [vmem:[#allocation3 + $0x90] sm:$0xff]
    %v83 = vld [vmem:[#allocation3 + $0x98] sm:$0xff]
    %v84 = vld [vmem:[#allocation3 + $0xa0] sm:$0xff]
    %v85 = vld [vmem:[#allocation3 + $0xa8] sm:$0xff]
    %v86 = vld [vmem:[#allocation3 + $0xb0] sm:$0xff]
    %v87 = vld [vmem:[#allocation3 + $0xb8] sm:$0xff]
    %v88 = vld [vmem:[#allocation3 + $0xc0] sm:$0xff]
    %v89 = vld [vmem:[#allocation3 + $0xc8] sm:$0xff]
    %v90 = vld [vmem:[#allocation3 + $0xd0] sm:$0xff]
    %v91 = vld [vmem:[#allocation3 + $0xd8] sm:$0xff]
    %v92 = vld [vmem:[#allocation3 + $0xe0] sm:$0xff]
    %v93 = vld [vmem:[#allocation3 + $0xe8] sm:$0xff]
    %v94 = vld [vmem:[#allocation3 + $0xf0] sm:$0xff]
    %v95 = vld [vmem:[#allocation3 + $0xf8] sm:$0xff]
    %v96 = vld [vmem:[#allocation6] sm:$0xff]
    %v97 = vld [vmem:[#allocation6 + $0x8] sm:$0xff]
    %vm98 = vcmask 130048
    %v100 = vsel %vm98, %v64, 0
    %v103 = vsel %vm98, %v65, 0
    %v106 = vsel %vm98, %v66, 0
    %v109 = vsel %vm98, %v67, 0
    %v112 = vsel %vm98, %v68, 0
    %v115 = vsel %vm98, %v69, 0
    %v118 = vsel %vm98, %v70, 0
    %v121 = vsel %vm98, %v71, 0
    %v124 = vsel %vm98, %v72, 0
    %v127 = vsel %vm98, %v73, 0
    %v130 = vsel %vm98, %v74, 0
    %v133 = vsel %vm98, %v75, 0
    %v136 = vsel %vm98, %v76, 0
    %v139 = vsel %vm98, %v77, 0
    %v142 = vsel %vm98, %v78, 0
    %v145 = vsel %vm98, %v79, 0
    %v148 = vsel %vm98, %v80, 0
    %v151 = vsel %vm98, %v81, 0
    %v154 = vsel %vm98, %v82, 0
    %v157 = vsel %vm98, %v83, 0
    %v160 = vsel %vm98, %v84, 0
    %v163 = vsel %vm98, %v85, 0
    %v166 = vsel %vm98, %v86, 0
    %v169 = vsel %vm98, %v87, 0
    %v172 = vsel %vm98, %v88, 0
    %v175 = vsel %vm98, %v89, 0
    %v178 = vsel %vm98, %v90, 0
    %v181 = vsel %vm98, %v91, 0
    %v184 = vsel %vm98, %v92, 0
    %v187 = vsel %vm98, %v93, 0
    %v190 = vsel %vm98, %v94, 0
    %v193 = vsel %vm98, %v95, 0
    %195 = vmatprep.subr.mxu0 0.0
    %196 = vmatpush1.msra.mxu0 %v96
    %197 = vmatprep.subr.mxu0 0.0
    %198 = vmatpush1.msra.mxu0 %v97
    %199 = vmatprep.subr.mxu0 0.0
    %200 = vmatpush1.msra.mxu0 0.0
    %201 = vmatprep.subr.mxu0 0.0
    %202 = vmatpush1.msra.mxu0 0.0
    %203 = vmatprep.subr.mxu0 0.0
    %204 = vmatpush1.msra.mxu0 0.0
    %205 = vmatprep.subr.mxu0 0.0
    %206 = vmatpush1.msra.mxu0 0.0
    %207 = vmatprep.subr.mxu0 0.0
    %208 = vmatpush1.msra.mxu0 0.0
    %209 = vmatprep.subr.mxu0 0.0
    %210 = vmatpush1.msra.mxu0 0.0
    %211 = vmatprep.subr.mxu0 0.0
    %212 = vmatpush1.msra.mxu0 0.0
    %213 = vmatprep.subr.mxu0 0.0
    %214 = vmatpush1.msra.mxu0 0.0
    %215 = vmatprep.subr.mxu0 0.0
    %216 = vmatpush1.msra.mxu0 0.0
    %217 = vmatprep.subr.mxu0 0.0
    %218 = vmatpush1.msra.mxu0 0.0
    %219 = vmatprep.subr.mxu0 0.0
    %220 = vmatpush1.msra.mxu0 0.0
    %221 = vmatprep.subr.mxu0 0.0
    %222 = vmatpush1.msra.mxu0 0.0
    %223 = vmatprep.subr.mxu0 0.0
    %224 = vmatpush1.msra.mxu0 0.0
    %225 = vmatprep.subr.mxu0 0.0
    %226 = vmatpush1.msra.mxu0 0.0
    %227 = vmatprep.subr.mxu0 0.0
    %228 = vmatpush1.msra.mxu0 0.0
    %229 = vmatprep.subr.mxu0 0.0
    %230 = vmatpush1.msra.mxu0 0.0
    %231 = vmatprep.subr.mxu0 0.0
    %232 = vmatpush1.msra.mxu0 0.0
    %233 = vmatprep.subr.mxu0 0.0
    %234 = vmatpush1.msra.mxu0 0.0
    %235 = vmatprep.subr.mxu0 0.0
    %236 = vmatpush1.msra.mxu0 0.0
    %237 = vmatprep.subr.mxu0 0.0
    %238 = vmatpush1.msra.mxu0 0.0
    %239 = vmatprep.subr.mxu0 0.0
    %240 = vmatpush1.msra.mxu0 0.0
    %241 = vmatprep.subr.mxu0 0.0
    %242 = vmatpush1.msra.mxu0 0.0
    %243 = vmatprep.subr.mxu0 0.0
    %244 = vmatpush1.msra.mxu0 0.0
    %245 = vmatprep.subr.mxu0 0.0
    %246 = vmatpush1.msra.mxu0 0.0
    %247 = vmatprep.subr.mxu0 0.0
    %248 = vmatpush1.msra.mxu0 0.0
    %249 = vmatprep.subr.mxu0 0.0
    %250 = vmatpush1.msra.mxu0 0.0
    %251 = vmatprep.subr.mxu0 0.0
    %252 = vmatpush1.msra.mxu0 0.0
    %253 = vmatprep.subr.mxu0 0.0
    %254 = vmatpush1.msra.mxu0 0.0
    %255 = vmatprep.subr.mxu0 0.0
    %256 = vmatpush1.msra.mxu0 0.0
    %257 = vmatprep.subr.mxu0 0.0
    %258 = vmatpush1.msra.mxu0 0.0
    %259 = vmatprep.mubr.f32.mxu0 0.0
    %260 = vmatmul.mubr.f32.gmra.mrb[0].mxu0 %v100
    %v261 = vpop.f32.mrb[0].mxu0
    %v262 = vadd.f32 0.0, %v261
    %v263 = vpop.f32.mrb[0].mxu0
    %264 = vmatprep.mubr.f32.mxu0 0.0
    %265 = vmatmul.mubr.f32.gmra.mrb[0].mxu0 %v103
    %v266 = vpop.f32.mrb[0].mxu0
    %v267 = vadd.f32 0.0, %v266
    %v268 = vpop.f32.mrb[0].mxu0
    %269 = vmatprep.mubr.f32.mxu0 0.0
    %270 = vmatmul.mubr.f32.gmra.mrb[0].mxu0 %v106
    %v271 = vpop.f32.mrb[0].mxu0
    %v272 = vadd.f32 0.0, %v271
    %v273 = vpop.f32.mrb[0].mxu0
    %274 = vmatprep.mubr.f32.mxu0 0.0
    %275 = vmatmul.mubr.f32.gmra.mrb[0].mxu0 %v109
    %v276 = vpop.f32.mrb[0].mxu0
    %v277 = vadd.f32 0.0, %v276
    %v278 = vpop.f32.mrb[0].mxu0
    %279 = vmatprep.mubr.f32.mxu0 0.0
    %280 = vmatmul.mubr.f32.gmra.mrb[0].mxu0 %v112
    %v281 = vpop.f32.mrb[0].mxu0
    %v282 = vadd.f32 0.0, %v281
    %v283 = vpop.f32.mrb[0].mxu0
    %284 = vmatprep.mubr.f32.mxu0 0.0
    %285 = vmatmul.mubr.f32.gmra.mrb[0].mxu0 %v115
    %v286 = vpop.f32.mrb[0].mxu0
    %v287 = vadd.f32 0.0, %v286
    %v288 = vpop.f32.mrb[0].mxu0
    %289 = vmatprep.mubr.f32.mxu0 0.0
    %290 = vmatmul.mubr.f32.gmra.mrb[0].mxu0 %v118
    %v291 = vpop.f32.mrb[0].mxu0
    %v292 = vadd.f32 0.0, %v291
    %v293 = vpop.f32.mrb[0].mxu0
    %294 = vmatprep.mubr.f32.mxu0 0.0
    %295 = vmatmul.mubr.f32.gmra.mrb[0].mxu0 %v121
    %v296 = vpop.f32.mrb[0].mxu0
    %v297 = vadd.f32 0.0, %v296
    %v298 = vpop.f32.mrb[0].mxu0
    %299 = vmatprep.mubr.f32.mxu0 0.0
    %300 = vmatmul.mubr.f32.gmra.mrb[0].mxu0 %v124
    %v301 = vpop.f32.mrb[0].mxu0
    %v302 = vadd.f32 0.0, %v301
    %v303 = vpop.f32.mrb[0].mxu0
    %304 = vmatprep.mubr.f32.mxu0 0.0
    %305 = vmatmul.mubr.f32.gmra.mrb[0].mxu0 %v127
    %v306 = vpop.f32.mrb[0].mxu0
    %v307 = vadd.f32 0.0, %v306
    %v308 = vpop.f32.mrb[0].mxu0
    %309 = vmatprep.mubr.f32.mxu0 0.0
    %310 = vmatmul.mubr.f32.gmra.mrb[0].mxu0 %v130
    %v311 = vpop.f32.mrb[0].mxu0
    %v312 = vadd.f32 0.0, %v311
    %v313 = vpop.f32.mrb[0].mxu0
    %314 = vmatprep.mubr.f32.mxu0 0.0
    %315 = vmatmul.mubr.f32.gmra.mrb[0].mxu0 %v133
    %v316 = vpop.f32.mrb[0].mxu0
    %v317 = vadd.f32 0.0, %v316
    %v318 = vpop.f32.mrb[0].mxu0
    %319 = vmatprep.mubr.f32.mxu0 0.0
    %320 = vmatmul.mubr.f32.gmra.mrb[0].mxu0 %v136
    %v321 = vpop.f32.mrb[0].mxu0
    %v322 = vadd.f32 0.0, %v321
    %v323 = vpop.f32.mrb[0].mxu0
    %324 = vmatprep.mubr.f32.mxu0 0.0
    %325 = vmatmul.mubr.f32.gmra.mrb[0].mxu0 %v139
    %v326 = vpop.f32.mrb[0].mxu0
    %v327 = vadd.f32 0.0, %v326
    %v328 = vpop.f32.mrb[0].mxu0
    %329 = vmatprep.mubr.f32.mxu0 0.0
    %330 = vmatmul.mubr.f32.gmra.mrb[0].mxu0 %v142
    %v331 = vpop.f32.mrb[0].mxu0
    %v332 = vadd.f32 0.0, %v331
    %v333 = vpop.f32.mrb[0].mxu0
    %334 = vmatprep.mubr.f32.mxu0 0.0
    %335 = vmatmul.mubr.f32.gmra.mrb[0].mxu0 %v145
    %v336 = vpop.f32.mrb[0].mxu0
    %v337 = vadd.f32 0.0, %v336
    %v338 = vpop.f32.mrb[0].mxu0
    %339 = vmatprep.mubr.f32.mxu0 0.0
    %340 = vmatmul.mubr.f32.gmra.mrb[0].mxu0 %v148
    %v341 = vpop.f32.mrb[0].mxu0
    %v342 = vadd.f32 0.0, %v341
    %v343 = vpop.f32.mrb[0].mxu0
    %344 = vmatprep.mubr.f32.mxu0 0.0
    %345 = vmatmul.mubr.f32.gmra.mrb[0].mxu0 %v151
    %v346 = vpop.f32.mrb[0].mxu0
    %v347 = vadd.f32 0.0, %v346
    %v348 = vpop.f32.mrb[0].mxu0
    %349 = vmatprep.mubr.f32.mxu0 0.0
    %350 = vmatmul.mubr.f32.gmra.mrb[0].mxu0 %v154
    %v351 = vpop.f32.mrb[0].mxu0
    %v352 = vadd.f32 0.0, %v351
    %v353 = vpop.f32.mrb[0].mxu0
    %354 = vmatprep.mubr.f32.mxu0 0.0
    %355 = vmatmul.mubr.f32.gmra.mrb[0].mxu0 %v157
    %v356 = vpop.f32.mrb[0].mxu0
    %v357 = vadd.f32 0.0, %v356
    %v358 = vpop.f32.mrb[0].mxu0
    %359 = vmatprep.mubr.f32.mxu0 0.0
    %360 = vmatmul.mubr.f32.gmra.mrb[0].mxu0 %v160
    %v361 = vpop.f32.mrb[0].mxu0
    %v362 = vadd.f32 0.0, %v361
    %v363 = vpop.f32.mrb[0].mxu0
    %364 = vmatprep.mubr.f32.mxu0 0.0
    %365 = vmatmul.mubr.f32.gmra.mrb[0].mxu0 %v163
    %v366 = vpop.f32.mrb[0].mxu0
    %v367 = vadd.f32 0.0, %v366
    %v368 = vpop.f32.mrb[0].mxu0
    %369 = vmatprep.mubr.f32.mxu0 0.0
    %370 = vmatmul.mubr.f32.gmra.mrb[0].mxu0 %v166
    %v371 = vpop.f32.mrb[0].mxu0
    %v372 = vadd.f32 0.0, %v371
    %v373 = vpop.f32.mrb[0].mxu0
    %374 = vmatprep.mubr.f32.mxu0 0.0
    %375 = vmatmul.mubr.f32.gmra.mrb[0].mxu0 %v169
    %v376 = vpop.f32.mrb[0].mxu0
    %v377 = vadd.f32 0.0, %v376
    %v378 = vpop.f32.mrb[0].mxu0
    %379 = vmatprep.mubr.f32.mxu0 0.0
    %380 = vmatmul.mubr.f32.gmra.mrb[0].mxu0 %v172
    %v381 = vpop.f32.mrb[0].mxu0
    %v382 = vadd.f32 0.0, %v381
    %v383 = vpop.f32.mrb[0].mxu0
    %384 = vmatprep.mubr.f32.mxu0 0.0
    %385 = vmatmul.mubr.f32.gmra.mrb[0].mxu0 %v175
    %v386 = vpop.f32.mrb[0].mxu0
    %v387 = vadd.f32 0.0, %v386
    %v388 = vpop.f32.mrb[0].mxu0
    %389 = vmatprep.mubr.f32.mxu0 0.0
    %390 = vmatmul.mubr.f32.gmra.mrb[0].mxu0 %v178
    %v391 = vpop.f32.mrb[0].mxu0
    %v392 = vadd.f32 0.0, %v391
    %v393 = vpop.f32.mrb[0].mxu0
    %394 = vmatprep.mubr.f32.mxu0 0.0
    %395 = vmatmul.mubr.f32.gmra.mrb[0].mxu0 %v181
    %v396 = vpop.f32.mrb[0].mxu0
    %v397 = vadd.f32 0.0, %v396
    %v398 = vpop.f32.mrb[0].mxu0
    %399 = vmatprep.mubr.f32.mxu0 0.0
    %400 = vmatmul.mubr.f32.gmra.mrb[0].mxu0 %v184
    %v401 = vpop.f32.mrb[0].mxu0
    %v402 = vadd.f32 0.0, %v401
    %v403 = vpop.f32.mrb[0].mxu0
    %404 = vmatprep.mubr.f32.mxu0 0.0
    %405 = vmatmul.mubr.f32.gmra.mrb[0].mxu0 %v187
    %v406 = vpop.f32.mrb[0].mxu0
    %v407 = vadd.f32 0.0, %v406
    %v408 = vpop.f32.mrb[0].mxu0
    %409 = vmatprep.mubr.f32.mxu0 0.0
    %410 = vmatmul.mubr.f32.gmra.mrb[0].mxu0 %v190
    %v411 = vpop.f32.mrb[0].mxu0
    %v412 = vadd.f32 0.0, %v411
    %v413 = vpop.f32.mrb[0].mxu0
    %414 = vmatprep.mubr.f32.mxu0 0.0
    %415 = vmatmul.mubr.f32.gmra.mrb[0].mxu0 %v193
    %v416 = vpop.f32.mrb[0].mxu0
    %v417 = vadd.f32 0.0, %v416
    %v418 = vpop.f32.mrb[0].mxu0
    %419 = vdwg.mxu0
    %vm420 = vcmask 261120
    %v421 = vsel %vm420, %v262, 0.0
    %v422 = vrot.slane %v421, 4
    %v423 = vadd.f32 %v421, %v422
    %v424 = vrot.slane %v423, 2
    %v425 = vadd.f32 %v423, %v424
    %v426 = vrot.slane %v425, 1
    %v427 = vadd.f32 %v425, %v426
    %v428 = vsel %vm420, %v267, 0.0
    %v429 = vrot.slane %v428, 4
    %v430 = vadd.f32 %v428, %v429
    %v431 = vrot.slane %v430, 2
    %v432 = vadd.f32 %v430, %v431
    %v433 = vrot.slane %v432, 1
    %v434 = vadd.f32 %v432, %v433
    %v435 = vsel %vm420, %v272, 0.0
    %v436 = vrot.slane %v435, 4
    %v437 = vadd.f32 %v435, %v436
    %v438 = vrot.slane %v437, 2
    %v439 = vadd.f32 %v437, %v438
    %v440 = vrot.slane %v439, 1
    %v441 = vadd.f32 %v439, %v440
    %v442 = vsel %vm420, %v277, 0.0
    %v443 = vrot.slane %v442, 4
    %v444 = vadd.f32 %v442, %v443
    %v445 = vrot.slane %v444, 2
    %v446 = vadd.f32 %v444, %v445
    %v447 = vrot.slane %v446, 1
    %v448 = vadd.f32 %v446, %v447
    %v449 = vsel %vm420, %v282, 0.0
    %v450 = vrot.slane %v449, 4
    %v451 = vadd.f32 %v449, %v450
    %v452 = vrot.slane %v451, 2
    %v453 = vadd.f32 %v451, %v452
    %v454 = vrot.slane %v453, 1
    %v455 = vadd.f32 %v453, %v454
    %v456 = vsel %vm420, %v287, 0.0
    %v457 = vrot.slane %v456, 4
    %v458 = vadd.f32 %v456, %v457
    %v459 = vrot.slane %v458, 2
    %v460 = vadd.f32 %v458, %v459
    %v461 = vrot.slane %v460, 1
    %v462 = vadd.f32 %v460, %v461
    %v463 = vsel %vm420, %v292, 0.0
    %v464 = vrot.slane %v463, 4
    %v465 = vadd.f32 %v463, %v464
    %v466 = vrot.slane %v465, 2
    %v467 = vadd.f32 %v465, %v466
    %v468 = vrot.slane %v467, 1
    %v469 = vadd.f32 %v467, %v468
    %v470 = vsel %vm420, %v297, 0.0
    %v471 = vrot.slane %v470, 4
    %v472 = vadd.f32 %v470, %v471
    %v473 = vrot.slane %v472, 2
    %v474 = vadd.f32 %v472, %v473
    %v475 = vrot.slane %v474, 1
    %v476 = vadd.f32 %v474, %v475
    %v477 = vsel %vm420, %v302, 0.0
    %v478 = vrot.slane %v477, 4
    %v479 = vadd.f32 %v477, %v478
    %v480 = vrot.slane %v479, 2
    %v481 = vadd.f32 %v479, %v480
    %v482 = vrot.slane %v481, 1
    %v483 = vadd.f32 %v481, %v482
    %v484 = vsel %vm420, %v307, 0.0
    %v485 = vrot.slane %v484, 4
    %v486 = vadd.f32 %v484, %v485
    %v487 = vrot.slane %v486, 2
    %v488 = vadd.f32 %v486, %v487
    %v489 = vrot.slane %v488, 1
    %v490 = vadd.f32 %v488, %v489
    %v491 = vsel %vm420, %v312, 0.0
    %v492 = vrot.slane %v491, 4
    %v493 = vadd.f32 %v491, %v492
    %v494 = vrot.slane %v493, 2
    %v495 = vadd.f32 %v493, %v494
    %v496 = vrot.slane %v495, 1
    %v497 = vadd.f32 %v495, %v496
    %v498 = vsel %vm420, %v317, 0.0
    %v499 = vrot.slane %v498, 4
    %v500 = vadd.f32 %v498, %v499
    %v501 = vrot.slane %v500, 2
    %v502 = vadd.f32 %v500, %v501
    %v503 = vrot.slane %v502, 1
    %v504 = vadd.f32 %v502, %v503
    %v505 = vsel %vm420, %v322, 0.0
    %v506 = vrot.slane %v505, 4
    %v507 = vadd.f32 %v505, %v506
    %v508 = vrot.slane %v507, 2
    %v509 = vadd.f32 %v507, %v508
    %v510 = vrot.slane %v509, 1
    %v511 = vadd.f32 %v509, %v510
    %v512 = vsel %vm420, %v327, 0.0
    %v513 = vrot.slane %v512, 4
    %v514 = vadd.f32 %v512, %v513
    %v515 = vrot.slane %v514, 2
    %v516 = vadd.f32 %v514, %v515
    %v517 = vrot.slane %v516, 1
    %v518 = vadd.f32 %v516, %v517
    %v519 = vsel %vm420, %v332, 0.0
    %v520 = vrot.slane %v519, 4
    %v521 = vadd.f32 %v519, %v520
    %v522 = vrot.slane %v521, 2
    %v523 = vadd.f32 %v521, %v522
    %v524 = vrot.slane %v523, 1
    %v525 = vadd.f32 %v523, %v524
    %v526 = vsel %vm420, %v337, 0.0
    %v527 = vrot.slane %v526, 4
    %v528 = vadd.f32 %v526, %v527
    %v529 = vrot.slane %v528, 2
    %v530 = vadd.f32 %v528, %v529
    %v531 = vrot.slane %v530, 1
    %v532 = vadd.f32 %v530, %v531
    %v533 = vsel %vm420, %v342, 0.0
    %v534 = vrot.slane %v533, 4
    %v535 = vadd.f32 %v533, %v534
    %v536 = vrot.slane %v535, 2
    %v537 = vadd.f32 %v535, %v536
    %v538 = vrot.slane %v537, 1
    %v539 = vadd.f32 %v537, %v538
    %v540 = vsel %vm420, %v347, 0.0
    %v541 = vrot.slane %v540, 4
    %v542 = vadd.f32 %v540, %v541
    %v543 = vrot.slane %v542, 2
    %v544 = vadd.f32 %v542, %v543
    %v545 = vrot.slane %v544, 1
    %v546 = vadd.f32 %v544, %v545
    %v547 = vsel %vm420, %v352, 0.0
    %v548 = vrot.slane %v547, 4
    %v549 = vadd.f32 %v547, %v548
    %v550 = vrot.slane %v549, 2
    %v551 = vadd.f32 %v549, %v550
    %v552 = vrot.slane %v551, 1
    %v553 = vadd.f32 %v551, %v552
    %v554 = vsel %vm420, %v357, 0.0
    %v555 = vrot.slane %v554, 4
    %v556 = vadd.f32 %v554, %v555
    %v557 = vrot.slane %v556, 2
    %v558 = vadd.f32 %v556, %v557
    %v559 = vrot.slane %v558, 1
    %v560 = vadd.f32 %v558, %v559
    %v561 = vsel %vm420, %v362, 0.0
    %v562 = vrot.slane %v561, 4
    %v563 = vadd.f32 %v561, %v562
    %v564 = vrot.slane %v563, 2
    %v565 = vadd.f32 %v563, %v564
    %v566 = vrot.slane %v565, 1
    %v567 = vadd.f32 %v565, %v566
    %v568 = vsel %vm420, %v367, 0.0
    %v569 = vrot.slane %v568, 4
    %v570 = vadd.f32 %v568, %v569
    %v571 = vrot.slane %v570, 2
    %v572 = vadd.f32 %v570, %v571
    %v573 = vrot.slane %v572, 1
    %v574 = vadd.f32 %v572, %v573
    %v575 = vsel %vm420, %v372, 0.0
    %v576 = vrot.slane %v575, 4
    %v577 = vadd.f32 %v575, %v576
    %v578 = vrot.slane %v577, 2
    %v579 = vadd.f32 %v577, %v578
    %v580 = vrot.slane %v579, 1
    %v581 = vadd.f32 %v579, %v580
    %v582 = vsel %vm420, %v377, 0.0
    %v583 = vrot.slane %v582, 4
    %v584 = vadd.f32 %v582, %v583
    %v585 = vrot.slane %v584, 2
    %v586 = vadd.f32 %v584, %v585
    %v587 = vrot.slane %v586, 1
    %v588 = vadd.f32 %v586, %v587
    %v589 = vsel %vm420, %v382, 0.0
    %v590 = vrot.slane %v589, 4
    %v591 = vadd.f32 %v589, %v590
    %v592 = vrot.slane %v591, 2
    %v593 = vadd.f32 %v591, %v592
    %v594 = vrot.slane %v593, 1
    %v595 = vadd.f32 %v593, %v594
    %v596 = vsel %vm420, %v387, 0.0
    %v597 = vrot.slane %v596, 4
    %v598 = vadd.f32 %v596, %v597
    %v599 = vrot.slane %v598, 2
    %v600 = vadd.f32 %v598, %v599
    %v601 = vrot.slane %v600, 1
    %v602 = vadd.f32 %v600, %v601
    %v603 = vsel %vm420, %v392, 0.0
    %v604 = vrot.slane %v603, 4
    %v605 = vadd.f32 %v603, %v604
    %v606 = vrot.slane %v605, 2
    %v607 = vadd.f32 %v605, %v606
    %v608 = vrot.slane %v607, 1
    %v609 = vadd.f32 %v607, %v608
    %v610 = vsel %vm420, %v397, 0.0
    %v611 = vrot.slane %v610, 4
    %v612 = vadd.f32 %v610, %v611
    %v613 = vrot.slane %v612, 2
    %v614 = vadd.f32 %v612, %v613
    %v615 = vrot.slane %v614, 1
    %v616 = vadd.f32 %v614, %v615
    %v617 = vsel %vm420, %v402, 0.0
    %v618 = vrot.slane %v617, 4
    %v619 = vadd.f32 %v617, %v618
    %v620 = vrot.slane %v619, 2
    %v621 = vadd.f32 %v619, %v620
    %v622 = vrot.slane %v621, 1
    %v623 = vadd.f32 %v621, %v622
    %v624 = vsel %vm420, %v407, 0.0
    %v625 = vrot.slane %v624, 4
    %v626 = vadd.f32 %v624, %v625
    %v627 = vrot.slane %v626, 2
    %v628 = vadd.f32 %v626, %v627
    %v629 = vrot.slane %v628, 1
    %v630 = vadd.f32 %v628, %v629
    %v631 = vsel %vm420, %v412, 0.0
    %v632 = vrot.slane %v631, 4
    %v633 = vadd.f32 %v631, %v632
    %v634 = vrot.slane %v633, 2
    %v635 = vadd.f32 %v633, %v634
    %v636 = vrot.slane %v635, 1
    %v637 = vadd.f32 %v635, %v636
    %v638 = vsel %vm420, %v417, 0.0
    %v639 = vrot.slane %v638, 4
    %v640 = vadd.f32 %v638, %v639
    %v641 = vrot.slane %v640, 2
    %v642 = vadd.f32 %v640, %v641
    %v643 = vrot.slane %v642, 1
    %v644 = vadd.f32 %v642, %v643
    %v645 = vld [vmem:[#allocation2] sm:$0xff]
    %vm678 = vcmask 1041409
    %v679 = vsel %vm678, %v434, %v427
    %vm680 = vcmask 1042434
    %v681 = vsel %vm680, %v441, %v679
    %vm682 = vcmask 1043459
    %v683 = vsel %vm682, %v448, %v681
    %v684 = vsel %vm678, %v462, %v455
    %v685 = vsel %vm680, %v469, %v684
    %v686 = vsel %vm682, %v476, %v685
    %v687 = vsel %vm678, %v490, %v483
    %v688 = vsel %vm680, %v497, %v687
    %v689 = vsel %vm682, %v504, %v688
    %v690 = vsel %vm678, %v518, %v511
    %v691 = vsel %vm680, %v525, %v690
    %v692 = vsel %vm682, %v532, %v691
    %v693 = vsel %vm678, %v546, %v539
    %v694 = vsel %vm680, %v553, %v693
    %v695 = vsel %vm682, %v560, %v694
    %v696 = vsel %vm678, %v574, %v567
    %v697 = vsel %vm680, %v581, %v696
    %v698 = vsel %vm682, %v588, %v697
    %v699 = vsel %vm678, %v602, %v595
    %v700 = vsel %vm680, %v609, %v699
    %v701 = vsel %vm682, %v616, %v700
    %v702 = vsel %vm678, %v630, %v623
    %v703 = vsel %vm680, %v637, %v702
    %v704 = vsel %vm682, %v644, %v703
    %v713 = vcombine.low %v683, %v689
    %v715 = vunpack.c.l.s4 1983009808
    %v716 = vunpack.c.0.s8 %v715
    %v717 = vlaneseq
    %v718 = vshrl.u32 %v717, 7
    %v719 = vsub.s32 %v716, %v718
    %v720 = vrot.slane %v713, %v719
    %v721 = vcombine.low %v686, %v692
    %v723 = vunpack.c.l.s4 1983009808
    %v724 = vunpack.c.0.s8 %v723
    %v725 = vlaneseq
    %v726 = vshrl.u32 %v725, 7
    %v727 = vsub.s32 %v724, %v726
    %v728 = vrot.slane %v721, %v727
    %v729 = vcombine.low %v695, %v701
    %v731 = vunpack.c.l.s4 1983009808
    %v732 = vunpack.c.0.s8 %v731
    %v733 = vlaneseq
    %v734 = vshrl.u32 %v733, 7
    %v735 = vsub.s32 %v732, %v734
    %v736 = vrot.slane %v729, %v735
    %v737 = vcombine.low %v698, %v704
    %v739 = vunpack.c.l.s4 1983009808
    %v740 = vunpack.c.0.s8 %v739
    %v741 = vlaneseq
    %v742 = vshrl.u32 %v741, 7
    %v743 = vsub.s32 %v740, %v742
    %v744 = vrot.slane %v737, %v743
    %v745 = vcombine.low %v720, %v728
    %v746 = vcombine.high %v720, %v728
    %v748 = vunpack.c.l.s4 1934713408
    %v749 = vunpack.c.0.s8 %v748
    %v750 = vlaneseq
    %v751 = vshrl.u32 %v750, 7
    %v752 = vsub.s32 %v749, %v751
    %v753 = vrot.slane %v745, %v752
    %v755 = vunpack.c.l.s4 1934713408
    %v756 = vunpack.c.0.s8 %v755
    %v757 = vlaneseq
    %v758 = vshrl.u32 %v757, 7
    %v759 = vsub.s32 %v756, %v758
    %v760 = vrot.slane %v746, %v759
    %v761 = vcombine.low %v736, %v744
    %v762 = vcombine.high %v736, %v744
    %v764 = vunpack.c.l.s4 1934713408
    %v765 = vunpack.c.0.s8 %v764
    %v766 = vlaneseq
    %v767 = vshrl.u32 %v766, 7
    %v768 = vsub.s32 %v765, %v767
    %v769 = vrot.slane %v761, %v768
    %v771 = vunpack.c.l.s4 1934713408
    %v772 = vunpack.c.0.s8 %v771
    %v773 = vlaneseq
    %v774 = vshrl.u32 %v773, 7
    %v775 = vsub.s32 %v772, %v774
    %v776 = vrot.slane %v762, %v775
    %v777 = vcombine.low %v753, %v769
    %v778 = vcombine.high %v753, %v769
    %v779 = vcombine.low %v760, %v776
    %v780 = vcombine.high %v760, %v776
    %782 = vrot.lane.b32.xlu0 %v778, 32
    %v783 = vpop.permute.xlu0 %782
    %786 = vrot.lane.b32.xlu0 %v779, 64
    %v787 = vpop.permute.xlu0 %786
    %790 = vrot.lane.b32.xlu0 %v780, 96
    %v791 = vpop.permute.xlu0 %790
    %v793 = vsel %vm420, %v777, %v783
    %vm794 = vcmask 523264
    %v795 = vsel %vm794, %v793, %v787
    %vm796 = vcmask 785408
    %v797 = vsel %vm796, %v795, %v791
    %v798 = vadd.f32 %v645, %v797
    %799 = vst [vmem:[#allocation2] sm:$0xff] %v798
    // Predicated region
    $region34: #{tpu_custom_call.1} parent=1 // pred_check
      %p800 = pneg %p59
    $region35: #{tpu_custom_call.1} parent=1 // pred_check_branch
      %802 = sbr.rel (%p800) target = $region37
    $region36: #{tpu_custom_call.1} parent=1 // pred_region
      %v803 = vld [vmem:[#allocation2] sm:$0xff]
      %v804 = vld [vmem:[#allocation8] sm:$0xff]
      %v805 = vld [vmem:[#allocation8 + $0x8] sm:$0xff]
      %v806 = vld [vmem:[#allocation8 + $0x10] sm:$0xff]
      %v807 = vld [vmem:[#allocation8 + $0x18] sm:$0xff]
      %v808 = vld [vmem:[#allocation8 + $0x20] sm:$0xff]
      %v809 = vld [vmem:[#allocation8 + $0x28] sm:$0xff]
      %v810 = vld [vmem:[#allocation8 + $0x30] sm:$0xff]
      %v811 = vld [vmem:[#allocation8 + $0x38] sm:$0xff]
      %v812 = vld [vmem:[#allocation8 + $0x40] sm:$0xff]
      %v813 = vld [vmem:[#allocation8 + $0x48] sm:$0xff]
      %v814 = vld [vmem:[#allocation8 + $0x50] sm:$0xff]
      %v815 = vld [vmem:[#allocation8 + $0x58] sm:$0xff]
      %v816 = vld [vmem:[#allocation8 + $0x60] sm:$0xff]
      %v817 = vld [vmem:[#allocation8 + $0x68] sm:$0xff]
      %v818 = vld [vmem:[#allocation8 + $0x70] sm:$0xff]
      %v819 = vld [vmem:[#allocation8 + $0x78] sm:$0xff]
      %v820 = vld [vmem:[%s3] sm:$0x1]
      %v822 = vlaneseq
      %v823 = vshrl.u32 %v822, 7
      %v824 = vsub.s32 0, %v823
      %v825 = vrot.slane %v820, %v824
      %827 = vmatprep.subr.mxu0 0.0
      %828 = vmatpush1.msra.mxu0 %v804
      %829 = vmatprep.subr.mxu0 0.0
      %830 = vmatpush1.msra.mxu0 %v805
      %831 = vmatprep.subr.mxu0 0.0
      %832 = vmatpush1.msra.mxu0 %v806
      %833 = vmatprep.subr.mxu0 0.0
      %834 = vmatpush1.msra.mxu0 %v807
      %835 = vmatprep.subr.mxu0 0.0
      %836 = vmatpush1.msra.mxu0 %v808
      %837 = vmatprep.subr.mxu0 0.0
      %838 = vmatpush1.msra.mxu0 %v809
      %839 = vmatprep.subr.mxu0 0.0
      %840 = vmatpush1.msra.mxu0 %v810
      %841 = vmatprep.subr.mxu0 0.0
      %842 = vmatpush1.msra.mxu0 %v811
      %843 = vmatprep.subr.mxu0 0.0
      %844 = vmatpush1.msra.mxu0 %v812
      %845 = vmatprep.subr.mxu0 0.0
      %846 = vmatpush1.msra.mxu0 %v813
      %847 = vmatprep.subr.mxu0 0.0
      %848 = vmatpush1.msra.mxu0 %v814
      %849 = vmatprep.subr.mxu0 0.0
      %850 = vmatpush1.msra.mxu0 %v815
      %851 = vmatprep.subr.mxu0 0.0
      %852 = vmatpush1.msra.mxu0 %v816
      %853 = vmatprep.subr.mxu0 0.0
      %854 = vmatpush1.msra.mxu0 %v817
      %855 = vmatprep.subr.mxu0 0.0
      %856 = vmatpush1.msra.mxu0 %v818
      %857 = vmatprep.subr.mxu0 0.0
      %858 = vmatpush1.msra.mxu0 %v819
      %859 = vmatprep.subr.mxu0 0.0
      %860 = vmatpush1.msra.mxu0 0.0
      %861 = vmatprep.subr.mxu0 0.0
      %862 = vmatpush1.msra.mxu0 0.0
      %863 = vmatprep.subr.mxu0 0.0
      %864 = vmatpush1.msra.mxu0 0.0
      %865 = vmatprep.subr.mxu0 0.0
      %866 = vmatpush1.msra.mxu0 0.0
      %867 = vmatprep.subr.mxu0 0.0
      %868 = vmatpush1.msra.mxu0 0.0
      %869 = vmatprep.subr.mxu0 0.0
      %870 = vmatpush1.msra.mxu0 0.0
      %871 = vmatprep.subr.mxu0 0.0
      %872 = vmatpush1.msra.mxu0 0.0
      %873 = vmatprep.subr.mxu0 0.0
      %874 = vmatpush1.msra.mxu0 0.0
      %875 = vmatprep.subr.mxu0 0.0
      %876 = vmatpush1.msra.mxu0 0.0
      %877 = vmatprep.subr.mxu0 0.0
      %878 = vmatpush1.msra.mxu0 0.0
      %879 = vmatprep.subr.mxu0 0.0
      %880 = vmatpush1.msra.mxu0 0.0
      %881 = vmatprep.subr.mxu0 0.0
      %882 = vmatpush1.msra.mxu0 0.0
      %883 = vmatprep.subr.mxu0 0.0
      %884 = vmatpush1.msra.mxu0 0.0
      %885 = vmatprep.subr.mxu0 0.0
      %886 = vmatpush1.msra.mxu0 0.0
      %887 = vmatprep.subr.mxu0 0.0
      %888 = vmatpush1.msra.mxu0 0.0
      %889 = vmatprep.subr.mxu0 0.0
      %890 = vmatpush1.msra.mxu0 0.0
      %891 = vmatprep.mubr.f32.mxu0 0.0
      %892 = vmatmul.mubr.f32.gmra.mrb[0].mxu0 %v803
      %v893 = vpop.f32.mrb[0].mxu0
      %v894 = vadd.f32 %v825, %v893
      %v895 = vpop.f32.mrb[0].mxu0
      %896 = vdwg.mxu0
      %897 = vst [vmem:[#allocation9] sm:$0xff] %v894
    $region37: #{tpu_custom_call.1} parent=1 // pred_fallthru
      _
    // Predicated region
    $region38: #{tpu_custom_call.1} parent=1 // pred_check
      _
    $region39: #{tpu_custom_call.1} parent=1 // pred_check_branch
      %899 = sbr.rel (0) target = $region41
    $region40: #{tpu_custom_call.1} parent=1 // pred_region
      %s901 = ssub.s32 128, 128
      %902 = vsyncadd [#allocation5], %s901
      %s904 = sshll.u32 [#allocation9], 4
      %s905 = int_to_ptr.vmem [resolvable:$true] %s904
      %907 = dma.vmem_to_hbm [thread:$0]  %s905, 128, %s4, [#allocation5]
    $region41: #{tpu_custom_call.1} parent=1 // pred_fallthru
      _
    // Predicated region
    $region42: #{tpu_custom_call.1} parent=1 // pred_check
      _
    $region43: #{tpu_custom_call.1} parent=1 // pred_check_branch
      %909 = sbr.rel (0) target = $region45
    $region44: #{tpu_custom_call.1} parent=1 // pred_region
      %910 = dma.done [#allocation5], 128
    $region45: #{tpu_custom_call.1} parent=1 // pred_fallthru
      _
    %911 = vsyncpa [#allocation4], 1
    %912 = vsyncpa [#allocation7], 1
    %913 = vsyncpa [#allocation5], 1

</llo_original>
